<compile_context>
chip_gen: v6e
topology: v6e:2x2x1
jax: 0.10.0
libtpu: 0.0.40
codegen_flags: <defaults>
</compile_context>

<pallas_src>
import functools

import jax
import jax.numpy as jnp
from jax.experimental import pallas as pl
from jax.experimental.pallas import tpu as pltpu

BN_EPS = 1e-5
VMEM_LIMIT_BYTES = 48 * 1024 * 1024      # explicit cap; defaults are only 16/32 MiB
RESIDENT_VMEM_BUDGET = 24 * 1024 * 1024  # conservative: fits v7x's 64 MiB physical VMEM


def _round_up(x, m):
    return (x + m - 1) // m * m


# --------------------------------------------------------------------------- #
# RESIDENT path: one grid step, all weights in VMEM, layers unrolled in-kernel #
# --------------------------------------------------------------------------- #
def _resident_kernel(x_ref, w_ref, shift_ref, o_ref, *, layer_num):
    """act_{l+1} = relu(act_l @ W_l + shift_l); every layer output stored to o[l]."""
    act = x_ref[...].astype(jnp.float32)
    for l in range(layer_num):  # static unroll (small L) -> no grid-step overhead
        lhs = act if w_ref.dtype == jnp.float32 else act.astype(w_ref.dtype)
        z = jnp.dot(lhs, w_ref[l], preferred_element_type=jnp.float32)
        act = jnp.maximum(z + shift_ref[l], 0.0)
        o_ref[l] = act.astype(o_ref.dtype)


@jax.jit
def _fused_resident(x_pad, w_all, shift_all):
    L, Hp, _ = w_all.shape
    Bp = x_pad.shape[0]
    kernel = functools.partial(_resident_kernel, layer_num=L)
    return pl.pallas_call(
        kernel,
        out_shape=jax.ShapeDtypeStruct((L, Bp, Hp), x_pad.dtype),
        grid=(1,),
        in_specs=[
            pl.BlockSpec((Bp, Hp), lambda i: (0, 0)),          # x
            pl.BlockSpec((L, Hp, Hp), lambda i: (0, 0, 0)),    # all folded weights
            pl.BlockSpec((L, 1, Hp), lambda i: (0, 0, 0)),     # all folded shifts
        ],
        out_specs=pl.BlockSpec((L, Bp, Hp), lambda i: (0, 0, 0)),
        compiler_params=pltpu.CompilerParams(
            dimension_semantics=("arbitrary",),
            vmem_limit_bytes=VMEM_LIMIT_BYTES,
        ),
    )(x_pad, w_all, shift_all)


# --------------------------------------------------------------------------- #
# STREAMED path: grid=(L,), activation resident in VMEM scratch, bf16 weights  #
# --------------------------------------------------------------------------- #
def _streamed_kernel(x_ref, w_ref, shift_ref, o_ref, act_ref):
    """Grid axis = layer index l.  Per step: act = relu(act @ W_l + shift_l).

    The activation lives in an f32 VMEM scratch that persists across grid steps,
    so it never leaves VMEM between layers.  W_l is streamed per layer (bf16 by
    default -> half the HBM bytes of f32, native MXU path) while the next layer's
    weight tile double-buffers behind the matmul.
    """
    l = pl.program_id(0)

    @pl.when(l == 0)
    def _():
        act_ref[...] = x_ref[...].astype(jnp.float32)

    act = act_ref[...]
    lhs = act if w_ref.dtype == jnp.float32 else act.astype(w_ref.dtype)
    z = jnp.dot(lhs, w_ref[...], preferred_element_type=jnp.float32)
    y = jnp.maximum(z + shift_ref[...], 0.0)
    act_ref[...] = y
    o_ref[...] = y.astype(o_ref.dtype)


@jax.jit
def _fused_streamed(x_pad, w_all, shift_all):
    L, Hp, _ = w_all.shape
    Bp = x_pad.shape[0]
    return pl.pallas_call(
        _streamed_kernel,
        out_shape=jax.ShapeDtypeStruct((L, Bp, Hp), x_pad.dtype),
        grid=(L,),
        in_specs=[
            pl.BlockSpec((Bp, Hp), lambda l: (0, 0)),            # x (consumed at l==0)
            # leading layer dim squeezed -> kernel sees clean 2-D refs
            pl.BlockSpec((None, Hp, Hp), lambda l: (l, 0, 0)),   # W_l (streamed, bf16)
            pl.BlockSpec((None, 1, Hp), lambda l: (l, 0, 0)),    # shift_l (f32)
        ],
        out_specs=pl.BlockSpec((None, Bp, Hp), lambda l: (l, 0, 0)),
        scratch_shapes=[pltpu.VMEM((Bp, Hp), jnp.float32)],       # resident activation
        compiler_params=pltpu.CompilerParams(
            # layer axis carries the activation -> sequential
            dimension_semantics=("arbitrary",),
            vmem_limit_bytes=VMEM_LIMIT_BYTES,
        ),
    )(x_pad, w_all, shift_all)


# --------------------------------------------------------------------------- #
# Parameter handling / wrapper                                                 #
# --------------------------------------------------------------------------- #
def init_params(key, hidden_size, layer_num, dtype=jnp.float32):
    """Deterministic parameter init matching LayerModel.__init__."""
    params = []
    for i in range(layer_num):
        k = jax.random.fold_in(key, i)
        # kaiming_normal_(nonlinearity='relu'): std = sqrt(2 / fan_in)
        std = (2.0 / hidden_size) ** 0.5
        w = std * jax.random.normal(k, (hidden_size, hidden_size), dtype=dtype)
        b = jnp.zeros((1, hidden_size), dtype=dtype)
        gamma = jnp.ones((1, hidden_size), dtype=dtype)
        beta = jnp.zeros((1, hidden_size), dtype=dtype)
        running_mean = jnp.zeros((1, hidden_size), dtype=dtype)
        running_var = jnp.ones((1, hidden_size), dtype=dtype)
        params.append((w, b, gamma, beta, running_mean, running_var))
    return params


def fold_params(params, h_pad, weight_dtype=jnp.float32):
    """Fold Linear bias + eval-mode BatchNorm into per-layer (W', shift).

    scale = gamma / sqrt(var + eps)
    W'    = W.T * scale                  # [in, out] layout -> no in-kernel transpose
    shift = (b - mean) * scale + beta
    so   relu(bn(x @ W.T + b)) == relu(x @ W' + shift).
    Padded rows/cols are zero so padded channels stay exactly 0 through the stack.
    W' is cast to `weight_dtype` (bf16 on the streamed path); shift stays f32.
    """
    ws, shifts = [], []
    for (w, b, gamma, beta, mean, var) in params:
        h = w.shape[0]
        scale = gamma * jax.lax.rsqrt(var + BN_EPS)                 # (1, H)
        w_f = (w.T * scale).astype(jnp.float32)                     # (H_in, H_out)
        shift = ((b - mean) * scale + beta).astype(jnp.float32)     # (1, H)
        w_pad = jnp.zeros((h_pad, h_pad), jnp.float32).at[:h, :h].set(w_f)
        s_pad = jnp.zeros((1, h_pad), jnp.float32).at[:, :h].set(shift)
        ws.append(w_pad.astype(weight_dtype))
        shifts.append(s_pad)
    return jnp.stack(ws), jnp.stack(shifts)          # (L,Hp,Hp) weight_dtype, (L,1,Hp) f32


def all_layers_forward(x, params, *, lane_align=128, force_path=None):
    """Mirrors AllLayers.forward: returns (final_x, [intermediate outputs except last]).

    force_path: None (auto) | "resident" | "streamed".
    lane_align: pad hidden dim to this multiple (use 256 on v6e/v7x for large H).
    """
    B, H = x.shape
    L = len(params)
    Bp = _round_up(B, 8)             # sublane-aligned batch
    Hp = _round_up(H, lane_align)    # lane-dense / MXU-aligned hidden dim

    # Rough resident footprint: weights + shifts + input + per-layer outputs (f32).
    resident_bytes = L * Hp * Hp * 4 + L * Hp * 4 + (L + 2) * Bp * Hp * 4
    use_resident = resident_bytes <= RESIDENT_VMEM_BUDGET
    if force_path == "resident":
        use_resident = True
    elif force_path == "streamed":
        use_resident = False

    # Resident path keeps f32 weights (tiny anyway); streamed path streams bf16 weights
    # (weight-bandwidth bound at realistic sizes -> ~2x fewer HBM bytes per layer).
    weight_dtype = jnp.float32 if use_resident else jnp.bfloat16
    w_all, shift_all = fold_params(params, Hp, weight_dtype=weight_dtype)

    x_pad = jnp.zeros((Bp, Hp), jnp.float32).at[:B, :H].set(x.astype(jnp.float32))
    if use_resident:
        out = _fused_resident(x_pad, w_all, shift_all)   # (L, Bp, Hp)
    else:
        out = _fused_streamed(x_pad, w_all, shift_all)   # (L, Bp, Hp)

    # NOTE: padded batch rows (B..Bp) are NOT zero after layer 1 (they become
    # relu(shift)); they are sliced off here and must not be relied upon.
    outs = [out[l, :B, :H] for l in range(L)]
    return outs[-1], outs[:-1]


def _reference_forward(x, params):
    """Pure-JAX reference (unfolded, f32) for correctness check."""
    outs = []
    for (w, b, gamma, beta, mean, var) in params:
        z = x @ w.T + b
        y = (z - mean) * jax.lax.rsqrt(var + BN_EPS) * gamma + beta
        x = jnp.maximum(y, 0.0)
        outs.append(x)
    return x, outs[:-1]


if __name__ == "__main__":
    hidden_size = 32
    layer_num = 3
    batch = 8

    key = jax.random.PRNGKey(0)
    kx, kp = jax.random.split(key)
    x = jax.random.normal(kx, (batch, hidden_size), dtype=jnp.float32)
    params = init_params(kp, hidden_size, layer_num)

    ref_out, ref_inter = _reference_forward(x, params)

    # --- resident (default for this toy size), f32 weights: tight tolerance ---
    out, intermediates = all_layers_forward(x, params)
    out = jax.block_until_ready(out)
    intermediates = [jax.block_until_ready(t) for t in intermediates]
    assert out.shape == (batch, hidden_size)
    assert len(intermediates) == layer_num - 1
    assert jnp.allclose(out, ref_out, atol=1e-4, rtol=1e-4)
    for a, r in zip(intermediates, ref_inter):
        assert jnp.allclose(a, r, atol=1e-4, rtol=1e-4)

    # --- streamed path (bf16 weights): loose tolerance due to bf16 matmul inputs ---
    out_s, inter_s = all_layers_forward(x, params, force_path="streamed")
    out_s = jax.block_until_ready(out_s)
    inter_s = [jax.block_until_ready(t) for t in inter_s]
    assert out_s.shape == (batch, hidden_size)
    assert jnp.allclose(out_s, ref_out, atol=1e-1, rtol=1e-1)
    for a, r in zip(inter_s, ref_inter):
        assert jnp.allclose(a, r, atol=1e-1, rtol=1e-1)

    print("KERNEL_OK")
</pallas_src>

<mosaic_0001>
module attributes {stable_mosaic.version = 11 : i64} {
  func.func @_resident_kernel(%arg0: i32, %arg1: memref<8x128xf32, #tpu.memory_space<vmem>>, %arg2: memref<3x128x128xf32, #tpu.memory_space<vmem>>, %arg3: memref<3x1x128xf32, #tpu.memory_space<vmem>>, %arg4: memref<3x8x128xf32, #tpu.memory_space<vmem>>) attributes {dimension_semantics = [#tpu.dimension_semantics<arbitrary>], iteration_bounds = array<i64: 1>, scalar_prefetch = 0 : i64, scratch_operands = 0 : i64, tpu.core_type = #tpu.core_type<tc>, window_params = [{pipeline_mode = #tpu.pipeline_mode<synchronous>, transform_indices = @transform_0, window_bounds = array<i64: 8, 128>}, {pipeline_mode = #tpu.pipeline_mode<synchronous>, transform_indices = @transform_1, window_bounds = array<i64: 3, 128, 128>}, {pipeline_mode = #tpu.pipeline_mode<synchronous>, transform_indices = @transform_2, window_bounds = array<i64: 3, 1, 128>}, {pipeline_mode = #tpu.pipeline_mode<synchronous>, transform_indices = @transform_3, window_bounds = array<i64: 3, 8, 128>}]} {
    %c0 = arith.constant 0 : index
    %c0_0 = arith.constant 0 : index
    %0 = vector.load %arg1[%c0, %c0_0] : memref<8x128xf32, #tpu.memory_space<vmem>>, vector<8x128xf32>
    %c0_1 = arith.constant 0 : index
    %c0_2 = arith.constant 0 : index
    %c0_3 = arith.constant 0 : index
    %1 = vector.load %arg2[%c0_1, %c0_2, %c0_3] : memref<3x128x128xf32, #tpu.memory_space<vmem>>, vector<1x128x128xf32>
    %2 = vector.shape_cast %1 : vector<1x128x128xf32> to vector<128x128xf32>
    %cst = arith.constant dense<0.000000e+00> : vector<8x128xf32>
    %3 = tpu.matmul %0, %2, %cst {dimension_numbers = #tpu.dot_dimension_numbers<[1], [0], [0], [1], [0, 0, 1, 1], [], []>} : vector<8x128xf32>, vector<128x128xf32>, vector<8x128xf32> -> vector<8x128xf32>
    %c0_4 = arith.constant 0 : index
    %c0_5 = arith.constant 0 : index
    %c0_6 = arith.constant 0 : index
    %4 = vector.load %arg3[%c0_4, %c0_5, %c0_6] : memref<3x1x128xf32, #tpu.memory_space<vmem>>, vector<1x1x128xf32>
    %5 = vector.shape_cast %4 : vector<1x1x128xf32> to vector<1x128xf32>
    %6 = vector.broadcast %5 : vector<1x128xf32> to vector<8x128xf32>
    %7 = arith.addf %3, %6 : vector<8x128xf32>
    %cst_7 = arith.constant 0.000000e+00 : f32
    %8 = vector.broadcast %cst_7 : f32 to vector<8x128xf32>
    %9 = arith.maximumf %7, %8 : vector<8x128xf32>
    %c0_8 = arith.constant 0 : index
    %c0_9 = arith.constant 0 : index
    %c0_10 = arith.constant 0 : index
    %10 = vector.load %arg4[%c0_8, %c0_9, %c0_10] : memref<3x8x128xf32, #tpu.memory_space<vmem>>, vector<1x8x128xf32>
    %11 = vector.shape_cast %10 : vector<1x8x128xf32> to vector<8x128xf32>
    %12 = vector.shape_cast %9 : vector<8x128xf32> to vector<1x8x128xf32>
    tpu.vector_store %arg4[%c0_8, %c0_9, %c0_10], %12 {strides = array<i32>} : memref<3x8x128xf32, #tpu.memory_space<vmem>>, vector<1x8x128xf32>,
    %c1 = arith.constant 1 : index
    %c0_11 = arith.constant 0 : index
    %c0_12 = arith.constant 0 : index
    %13 = vector.load %arg2[%c1, %c0_11, %c0_12] : memref<3x128x128xf32, #tpu.memory_space<vmem>>, vector<1x128x128xf32>
    %14 = vector.shape_cast %13 : vector<1x128x128xf32> to vector<128x128xf32>
    %cst_13 = arith.constant dense<0.000000e+00> : vector<8x128xf32>
    %15 = tpu.matmul %9, %14, %cst_13 {dimension_numbers = #tpu.dot_dimension_numbers<[1], [0], [0], [1], [0, 0, 1, 1], [], []>} : vector<8x128xf32>, vector<128x128xf32>, vector<8x128xf32> -> vector<8x128xf32>
    %c1_14 = arith.constant 1 : index
    %c0_15 = arith.constant 0 : index
    %c0_16 = arith.constant 0 : index
    %16 = vector.load %arg3[%c1_14, %c0_15, %c0_16] : memref<3x1x128xf32, #tpu.memory_space<vmem>>, vector<1x1x128xf32>
    %17 = vector.shape_cast %16 : vector<1x1x128xf32> to vector<1x128xf32>
    %18 = vector.broadcast %17 : vector<1x128xf32> to vector<8x128xf32>
    %19 = arith.addf %15, %18 : vector<8x128xf32>
    %cst_17 = arith.constant 0.000000e+00 : f32
    %20 = vector.broadcast %cst_17 : f32 to vector<8x128xf32>
    %21 = arith.maximumf %19, %20 : vector<8x128xf32>
    %c1_18 = arith.constant 1 : index
    %c0_19 = arith.constant 0 : index
    %c0_20 = arith.constant 0 : index
    %22 = vector.load %arg4[%c1_18, %c0_19, %c0_20] : memref<3x8x128xf32, #tpu.memory_space<vmem>>, vector<1x8x128xf32>
    %23 = vector.shape_cast %22 : vector<1x8x128xf32> to vector<8x128xf32>
    %24 = vector.shape_cast %21 : vector<8x128xf32> to vector<1x8x128xf32>
    tpu.vector_store %arg4[%c1_18, %c0_19, %c0_20], %24 {strides = array<i32>} : memref<3x8x128xf32, #tpu.memory_space<vmem>>, vector<1x8x128xf32>,
    %c2 = arith.constant 2 : index
    %c0_21 = arith.constant 0 : index
    %c0_22 = arith.constant 0 : index
    %25 = vector.load %arg2[%c2, %c0_21, %c0_22] : memref<3x128x128xf32, #tpu.memory_space<vmem>>, vector<1x128x128xf32>
    %26 = vector.shape_cast %25 : vector<1x128x128xf32> to vector<128x128xf32>
    %cst_23 = arith.constant dense<0.000000e+00> : vector<8x128xf32>
    %27 = tpu.matmul %21, %26, %cst_23 {dimension_numbers = #tpu.dot_dimension_numbers<[1], [0], [0], [1], [0, 0, 1, 1], [], []>} : vector<8x128xf32>, vector<128x128xf32>, vector<8x128xf32> -> vector<8x128xf32>
    %c2_24 = arith.constant 2 : index
    %c0_25 = arith.constant 0 : index
    %c0_26 = arith.constant 0 : index
    %28 = vector.load %arg3[%c2_24, %c0_25, %c0_26] : memref<3x1x128xf32, #tpu.memory_space<vmem>>, vector<1x1x128xf32>
    %29 = vector.shape_cast %28 : vector<1x1x128xf32> to vector<1x128xf32>
    %30 = vector.broadcast %29 : vector<1x128xf32> to vector<8x128xf32>
    %31 = arith.addf %27, %30 : vector<8x128xf32>
    %cst_27 = arith.constant 0.000000e+00 : f32
    %32 = vector.broadcast %cst_27 : f32 to vector<8x128xf32>
    %33 = arith.maximumf %31, %32 : vector<8x128xf32>
    %c2_28 = arith.constant 2 : index
    %c0_29 = arith.constant 0 : index
    %c0_30 = arith.constant 0 : index
    %34 = vector.load %arg4[%c2_28, %c0_29, %c0_30] : memref<3x8x128xf32, #tpu.memory_space<vmem>>, vector<1x8x128xf32>
    %35 = vector.shape_cast %34 : vector<1x8x128xf32> to vector<8x128xf32>
    %36 = vector.shape_cast %33 : vector<8x128xf32> to vector<1x8x128xf32>
    tpu.vector_store %arg4[%c2_28, %c0_29, %c0_30], %36 {strides = array<i32>} : memref<3x8x128xf32, #tpu.memory_space<vmem>>, vector<1x8x128xf32>,
    return
  }
  func.func @transform_0(%arg0: i32) -> (i32, i32) {
    %c0_i32 = arith.constant 0 : i32
    %c0_i32_0 = arith.constant 0 : i32
    %c0_i32_1 = arith.constant 0 : i32
    return %c0_i32, %c0_i32_0 : i32, i32
  }
  func.func @transform_1(%arg0: i32) -> (i32, i32, i32) {
    %c0_i32 = arith.constant 0 : i32
    %c0_i32_0 = arith.constant 0 : i32
    %c0_i32_1 = arith.constant 0 : i32
    %c0_i32_2 = arith.constant 0 : i32
    return %c0_i32, %c0_i32_0, %c0_i32_1 : i32, i32, i32
  }
  func.func @transform_2(%arg0: i32) -> (i32, i32, i32) {
    %c0_i32 = arith.constant 0 : i32
    %c0_i32_0 = arith.constant 0 : i32
    %c0_i32_1 = arith.constant 0 : i32
    %c0_i32_2 = arith.constant 0 : i32
    return %c0_i32, %c0_i32_0, %c0_i32_1 : i32, i32, i32
  }
  func.func @transform_3(%arg0: i32) -> (i32, i32, i32) {
    %c0_i32 = arith.constant 0 : i32
    %c0_i32_0 = arith.constant 0 : i32
    %c0_i32_1 = arith.constant 0 : i32
    %c0_i32_2 = arith.constant 0 : i32
    return %c0_i32, %c0_i32_0, %c0_i32_1 : i32, i32, i32
  }
}

</mosaic_0001>

<llo_original>
// kernel: _fused_resident.1
$region0: #{_fused_resident.1}
  #allocation0 [shape = 'u32[]', space=smem, size = 0x4, offset = 0x4, fixed_abs, tag = 'smem constant byte address 0x4 - core index']
  #allocation1 [shape = 'u32[144,128]{1,0:T(1,128)}', space=vmem, size = 0x12000, scoped, tag = 'internal scratch']
  %s0 = inlined_call_operand.hbm [shape: f32[8,128], index: 0, kind: input, shape index: {}]
  %s1 = inlined_call_operand.hbm [shape: f32[3,128,128], index: 1, kind: input, shape index: {}]
  %s2 = inlined_call_operand.vmem [shape: f32[3,1,128], index: 2, kind: input, shape index: {}]
  %s3 = inlined_call_operand.hbm [shape: f32[3,8,128], index: 3, kind: output, shape index: {}]
  %s4 = sld [smem:[#allocation0]]
  $region30: #{_fused_resident.1} parent=0
    _
  %s6 = ssub.s32 1, %s4
  %s7 = scalar_select 0, %s6, %s4
  $region1: #{_fused_resident.1} parent=0
    #allocation2 [shape = 'u8[4096]{0}', space=vmem, size = 0x1000, scoped, tag = 'input window, operand 0, single buffered']
    #allocation3 [shape = 's32[1]{0}', space=sflag, size = 0x4, scoped, tag = 'scoped memory for _fused_resident.1']
    #allocation4 [shape = 's32[1]{0}', space=sflag, size = 0x4, scoped, tag = 'scoped memory for _fused_resident.1']
    #allocation5 [shape = 'u8[196608]{0}', space=vmem, size = 0x30000, scoped, tag = 'input window, operand 1, single buffered']
    #allocation6 [shape = 's32[1]{0}', space=sflag, size = 0x4, scoped, tag = 'scoped memory for _fused_resident.1']
    #allocation7 [shape = 'u8[12288]{0}', space=vmem, size = 0x3000, scoped, tag = 'output window, operand 0, single buffered']
    %8 = vsyncpa [#allocation3], 0
    %9 = vsyncpa [#allocation6], 0
    %10 = vsyncpa [#allocation4], 0
    // Predicated region
    $region2: #{_fused_resident.1} parent=1 // pred_check
      _
    $region3: #{_fused_resident.1} parent=1 // pred_check_branch
      %12 = sbr.rel (0) target = $region5
    $region4: #{_fused_resident.1} parent=1 // pred_region
      %s14 = ssub.s32 128, 128
      %15 = vsyncadd [#allocation3], %s14
      %s17 = sshll.u32 [#allocation2], 4
      %s18 = int_to_ptr.vmem [resolvable:$true] %s17
      %20 = dma.hbm_to_vmem [thread:$0]  %s0, 128, %s18, [#allocation3]
    $region5: #{_fused_resident.1} parent=1 // pred_fallthru
      _
    // Predicated region
    $region6: #{_fused_resident.1} parent=1 // pred_check
      _
    $region7: #{_fused_resident.1} parent=1 // pred_check_branch
      %22 = sbr.rel (0) target = $region9
    $region8: #{_fused_resident.1} parent=1 // pred_region
      %s24 = ssub.s32 6144, 6144
      %25 = vsyncadd [#allocation6], %s24
      %s26 = sshll.u32 [#allocation5], 4
      %s27 = int_to_ptr.vmem [resolvable:$true] %s26
      %32 = dma.hbm_to_vmem [thread:$0]  %s1, 6144, %s27, [#allocation6], 128, 128, 8
    $region9: #{_fused_resident.1} parent=1 // pred_fallthru
      _
    // Predicated region
    $region10: #{_fused_resident.1} parent=1 // pred_check
      _
    $region11: #{_fused_resident.1} parent=1 // pred_check_branch
      %34 = sbr.rel (0) target = $region13
    $region12: #{_fused_resident.1} parent=1 // pred_region
      _
    $region13: #{_fused_resident.1} parent=1 // pred_fallthru
      _
    // Predicated region
    $region14: #{_fused_resident.1} parent=1 // pred_check
      _
    $region15: #{_fused_resident.1} parent=1 // pred_check_branch
      %36 = sbr.rel (0) target = $region17
    $region16: #{_fused_resident.1} parent=1 // pred_region
      %37 = dma.done [#allocation3], 128
    $region17: #{_fused_resident.1} parent=1 // pred_fallthru
      _
    // Predicated region
    $region18: #{_fused_resident.1} parent=1 // pred_check
      _
    $region19: #{_fused_resident.1} parent=1 // pred_check_branch
      %39 = sbr.rel (0) target = $region21
    $region20: #{_fused_resident.1} parent=1 // pred_region
      %40 = dma.done [#allocation6], 6144
    $region21: #{_fused_resident.1} parent=1 // pred_fallthru
      _
    %v41 = vld [vmem:[#allocation2] sm:$0xff]
    %v42 = vld [vmem:[#allocation5] sm:$0xff]
    %v43 = vld [vmem:[#allocation5 + $0x8] sm:$0xff]
    %v44 = vld [vmem:[#allocation5 + $0x10] sm:$0xff]
    %v45 = vld [vmem:[#allocation5 + $0x18] sm:$0xff]
    %v46 = vld [vmem:[#allocation5 + $0x20] sm:$0xff]
    %v47 = vld [vmem:[#allocation5 + $0x28] sm:$0xff]
    %v48 = vld [vmem:[#allocation5 + $0x30] sm:$0xff]
    %v49 = vld [vmem:[#allocation5 + $0x38] sm:$0xff]
    %v50 = vld [vmem:[#allocation5 + $0x40] sm:$0xff]
    %v51 = vld [vmem:[#allocation5 + $0x48] sm:$0xff]
    %v52 = vld [vmem:[#allocation5 + $0x50] sm:$0xff]
    %v53 = vld [vmem:[#allocation5 + $0x58] sm:$0xff]
    %v54 = vld [vmem:[#allocation5 + $0x60] sm:$0xff]
    %v55 = vld [vmem:[#allocation5 + $0x68] sm:$0xff]
    %v56 = vld [vmem:[#allocation5 + $0x70] sm:$0xff]
    %v57 = vld [vmem:[#allocation5 + $0x78] sm:$0xff]
    %v58 = vld [vmem:[%s2] sm:$0x1]
    %v60 = vlaneseq
    %v61 = vshrl.u32 %v60, 7
    %v62 = vsub.s32 0, %v61
    %v63 = vrot.slane %v58, %v62
    %65 = vmatprep.subr.mxu0 0.0
    %66 = vmatpush1.msra.mxu0 %v57
    %67 = vmatprep.subr.mxu0 0.0
    %68 = vmatpush1.msra.mxu0 %v56
    %69 = vmatprep.subr.mxu0 0.0
    %70 = vmatpush1.msra.mxu0 %v55
    %71 = vmatprep.subr.mxu0 0.0
    %72 = vmatpush1.msra.mxu0 %v54
    %73 = vmatprep.subr.mxu0 0.0
    %74 = vmatpush1.msra.mxu0 %v53
    %75 = vmatprep.subr.mxu0 0.0
    %76 = vmatpush1.msra.mxu0 %v52
    %77 = vmatprep.subr.mxu0 0.0
    %78 = vmatpush1.msra.mxu0 %v51
    %79 = vmatprep.subr.mxu0 0.0
    %80 = vmatpush1.msra.mxu0 %v50
    %81 = vmatprep.subr.mxu0 0.0
    %82 = vmatpush1.msra.mxu0 %v49
    %83 = vmatprep.subr.mxu0 0.0
    %84 = vmatpush1.msra.mxu0 %v48
    %85 = vmatprep.subr.mxu0 0.0
    %86 = vmatpush1.msra.mxu0 %v47
    %87 = vmatprep.subr.mxu0 0.0
    %88 = vmatpush1.msra.mxu0 %v46
    %89 = vmatprep.subr.mxu0 0.0
    %90 = vmatpush1.msra.mxu0 %v45
    %91 = vmatprep.subr.mxu0 0.0
    %92 = vmatpush1.msra.mxu0 %v44
    %93 = vmatprep.subr.mxu0 0.0
    %94 = vmatpush1.msra.mxu0 %v43
    %95 = vmatprep.subr.mxu0 0.0
    %96 = vmatpush1.msra.mxu0 %v42
    %97 = vmatprep.subr.mxu0 0.0
    %98 = vmatpush2.msra.mxu0 0.0
    %99 = vmatprep.subr.mxu0 0.0
    %100 = vmatpush2.msra.mxu0 0.0
    %101 = vmatprep.subr.mxu0 0.0
    %102 = vmatpush2.msra.mxu0 0.0
    %103 = vmatprep.subr.mxu0 0.0
    %104 = vmatpush2.msra.mxu0 0.0
    %105 = vmatprep.subr.mxu0 0.0
    %106 = vmatpush2.msra.mxu0 0.0
    %107 = vmatprep.subr.mxu0 0.0
    %108 = vmatpush2.msra.mxu0 0.0
    %109 = vmatprep.subr.mxu0 0.0
    %110 = vmatpush2.msra.mxu0 0.0
    %111 = vmatprep.subr.mxu0 0.0
    %112 = vmatpush2.msra.mxu0 0.0
    %113 = vmatprep.subr.mxu0 0.0
    %114 = vmatpush2.msra.mxu0 0.0
    %115 = vmatprep.subr.mxu0 0.0
    %116 = vmatpush2.msra.mxu0 0.0
    %117 = vmatprep.subr.mxu0 0.0
    %118 = vmatpush2.msra.mxu0 0.0
    %119 = vmatprep.subr.mxu0 0.0
    %120 = vmatpush2.msra.mxu0 0.0
    %121 = vmatprep.subr.mxu0 0.0
    %122 = vmatpush2.msra.mxu0 0.0
    %123 = vmatprep.subr.mxu0 0.0
    %124 = vmatpush2.msra.mxu0 0.0
    %125 = vmatprep.subr.mxu0 0.0
    %126 = vmatpush2.msra.mxu0 0.0
    %127 = vmatprep.subr.mxu0 0.0
    %128 = vmatpush2.msra.mxu0 0.0
    %129 = vmatprep.mubr.f32.mxu0 0.0
    %130 = vmatmul.mubr.f32.gmra.mxu0 %v41
    %v131 = vpop.f32.mrf.mxu0
    %v132 = vadd.f32 %v63, %v131
    %v133 = vpop.f32.mrf.mxu0
    %134 = vdwg.mxu0
    %v135 = vmax.f32 %v132, 0.0
    %136 = vst [vmem:[#allocation7] sm:$0xff] %v135
    %s137 = scalar_lea.vmem [#allocation5], 128
    %v138 = vld [vmem:[%s137] sm:$0xff]
    %v139 = vld [vmem:[%s137 + $0x8] sm:$0xff]
    %v140 = vld [vmem:[%s137 + $0x10] sm:$0xff]
    %v141 = vld [vmem:[%s137 + $0x18] sm:$0xff]
    %v142 = vld [vmem:[%s137 + $0x20] sm:$0xff]
    %v143 = vld [vmem:[%s137 + $0x28] sm:$0xff]
    %v144 = vld [vmem:[%s137 + $0x30] sm:$0xff]
    %v145 = vld [vmem:[%s137 + $0x38] sm:$0xff]
    %v146 = vld [vmem:[%s137 + $0x40] sm:$0xff]
    %v147 = vld [vmem:[%s137 + $0x48] sm:$0xff]
    %v148 = vld [vmem:[%s137 + $0x50] sm:$0xff]
    %v149 = vld [vmem:[%s137 + $0x58] sm:$0xff]
    %v150 = vld [vmem:[%s137 + $0x60] sm:$0xff]
    %v151 = vld [vmem:[%s137 + $0x68] sm:$0xff]
    %v152 = vld [vmem:[%s137 + $0x70] sm:$0xff]
    %v153 = vld [vmem:[%s137 + $0x78] sm:$0xff]
    %s154 = scalar_lea.vmem %s2, 1
    %v155 = vld [vmem:[%s154] sm:$0x1]
    %v157 = vlaneseq
    %v158 = vshrl.u32 %v157, 7
    %v159 = vsub.s32 0, %v158
    %v160 = vrot.slane %v155, %v159
    %162 = vmatprep.subr.mxu0 0.0
    %163 = vmatpush1.msra.mxu0 %v153
    %164 = vmatprep.subr.mxu0 0.0
    %165 = vmatpush1.msra.mxu0 %v152
    %166 = vmatprep.subr.mxu0 0.0
    %167 = vmatpush1.msra.mxu0 %v151
    %168 = vmatprep.subr.mxu0 0.0
    %169 = vmatpush1.msra.mxu0 %v150
    %170 = vmatprep.subr.mxu0 0.0
    %171 = vmatpush1.msra.mxu0 %v149
    %172 = vmatprep.subr.mxu0 0.0
    %173 = vmatpush1.msra.mxu0 %v148
    %174 = vmatprep.subr.mxu0 0.0
    %175 = vmatpush1.msra.mxu0 %v147
    %176 = vmatprep.subr.mxu0 0.0
    %177 = vmatpush1.msra.mxu0 %v146
    %178 = vmatprep.subr.mxu0 0.0
    %179 = vmatpush1.msra.mxu0 %v145
    %180 = vmatprep.subr.mxu0 0.0
    %181 = vmatpush1.msra.mxu0 %v144
    %182 = vmatprep.subr.mxu0 0.0
    %183 = vmatpush1.msra.mxu0 %v143
    %184 = vmatprep.subr.mxu0 0.0
    %185 = vmatpush1.msra.mxu0 %v142
    %186 = vmatprep.subr.mxu0 0.0
    %187 = vmatpush1.msra.mxu0 %v141
    %188 = vmatprep.subr.mxu0 0.0
    %189 = vmatpush1.msra.mxu0 %v140
    %190 = vmatprep.subr.mxu0 0.0
    %191 = vmatpush1.msra.mxu0 %v139
    %192 = vmatprep.subr.mxu0 0.0
    %193 = vmatpush1.msra.mxu0 %v138
    %194 = vmatprep.subr.mxu0 0.0
    %195 = vmatpush2.msra.mxu0 0.0
    %196 = vmatprep.subr.mxu0 0.0
    %197 = vmatpush2.msra.mxu0 0.0
    %198 = vmatprep.subr.mxu0 0.0
    %199 = vmatpush2.msra.mxu0 0.0
    %200 = vmatprep.subr.mxu0 0.0
    %201 = vmatpush2.msra.mxu0 0.0
    %202 = vmatprep.subr.mxu0 0.0
    %203 = vmatpush2.msra.mxu0 0.0
    %204 = vmatprep.subr.mxu0 0.0
    %205 = vmatpush2.msra.mxu0 0.0
    %206 = vmatprep.subr.mxu0 0.0
    %207 = vmatpush2.msra.mxu0 0.0
    %208 = vmatprep.subr.mxu0 0.0
    %209 = vmatpush2.msra.mxu0 0.0
    %210 = vmatprep.subr.mxu0 0.0
    %211 = vmatpush2.msra.mxu0 0.0
    %212 = vmatprep.subr.mxu0 0.0
    %213 = vmatpush2.msra.mxu0 0.0
    %214 = vmatprep.subr.mxu0 0.0
    %215 = vmatpush2.msra.mxu0 0.0
    %216 = vmatprep.subr.mxu0 0.0
    %217 = vmatpush2.msra.mxu0 0.0
    %218 = vmatprep.subr.mxu0 0.0
    %219 = vmatpush2.msra.mxu0 0.0
    %220 = vmatprep.subr.mxu0 0.0
    %221 = vmatpush2.msra.mxu0 0.0
    %222 = vmatprep.subr.mxu0 0.0
    %223 = vmatpush2.msra.mxu0 0.0
    %224 = vmatprep.subr.mxu0 0.0
    %225 = vmatpush2.msra.mxu0 0.0
    %226 = vmatprep.mubr.f32.mxu0 0.0
    %227 = vmatmul.mubr.f32.gmra.mxu0 %v135
    %v228 = vpop.f32.mrf.mxu0
    %v229 = vadd.f32 %v160, %v228
    %v230 = vpop.f32.mrf.mxu0
    %231 = vdwg.mxu0
    %v232 = vmax.f32 %v229, 0.0
    %s233 = scalar_lea.vmem [#allocation7], 8
    %234 = vst [vmem:[%s233] sm:$0xff] %v232
    %s235 = scalar_lea.vmem [#allocation5], 256
    %v236 = vld [vmem:[%s235] sm:$0xff]
    %v237 = vld [vmem:[%s235 + $0x8] sm:$0xff]
    %v238 = vld [vmem:[%s235 + $0x10] sm:$0xff]
    %v239 = vld [vmem:[%s235 + $0x18] sm:$0xff]
    %v240 = vld [vmem:[%s235 + $0x20] sm:$0xff]
    %v241 = vld [vmem:[%s235 + $0x28] sm:$0xff]
    %v242 = vld [vmem:[%s235 + $0x30] sm:$0xff]
    %v243 = vld [vmem:[%s235 + $0x38] sm:$0xff]
    %v244 = vld [vmem:[%s235 + $0x40] sm:$0xff]
    %v245 = vld [vmem:[%s235 + $0x48] sm:$0xff]
    %v246 = vld [vmem:[%s235 + $0x50] sm:$0xff]
    %v247 = vld [vmem:[%s235 + $0x58] sm:$0xff]
    %v248 = vld [vmem:[%s235 + $0x60] sm:$0xff]
    %v249 = vld [vmem:[%s235 + $0x68] sm:$0xff]
    %v250 = vld [vmem:[%s235 + $0x70] sm:$0xff]
    %v251 = vld [vmem:[%s235 + $0x78] sm:$0xff]
    %s252 = scalar_lea.vmem %s2, 2
    %v253 = vld [vmem:[%s252] sm:$0x1]
    %v255 = vlaneseq
    %v256 = vshrl.u32 %v255, 7
    %v257 = vsub.s32 0, %v256
    %v258 = vrot.slane %v253, %v257
    %260 = vmatprep.subr.mxu0 0.0
    %261 = vmatpush1.msra.mxu0 %v251
    %262 = vmatprep.subr.mxu0 0.0
    %263 = vmatpush1.msra.mxu0 %v250
    %264 = vmatprep.subr.mxu0 0.0
    %265 = vmatpush1.msra.mxu0 %v249
    %266 = vmatprep.subr.mxu0 0.0
    %267 = vmatpush1.msra.mxu0 %v248
    %268 = vmatprep.subr.mxu0 0.0
    %269 = vmatpush1.msra.mxu0 %v247
    %270 = vmatprep.subr.mxu0 0.0
    %271 = vmatpush1.msra.mxu0 %v246
    %272 = vmatprep.subr.mxu0 0.0
    %273 = vmatpush1.msra.mxu0 %v245
    %274 = vmatprep.subr.mxu0 0.0
    %275 = vmatpush1.msra.mxu0 %v244
    %276 = vmatprep.subr.mxu0 0.0
    %277 = vmatpush1.msra.mxu0 %v243
    %278 = vmatprep.subr.mxu0 0.0
    %279 = vmatpush1.msra.mxu0 %v242
    %280 = vmatprep.subr.mxu0 0.0
    %281 = vmatpush1.msra.mxu0 %v241
    %282 = vmatprep.subr.mxu0 0.0
    %283 = vmatpush1.msra.mxu0 %v240
    %284 = vmatprep.subr.mxu0 0.0
    %285 = vmatpush1.msra.mxu0 %v239
    %286 = vmatprep.subr.mxu0 0.0
    %287 = vmatpush1.msra.mxu0 %v238
    %288 = vmatprep.subr.mxu0 0.0
    %289 = vmatpush1.msra.mxu0 %v237
    %290 = vmatprep.subr.mxu0 0.0
    %291 = vmatpush1.msra.mxu0 %v236
    %292 = vmatprep.subr.mxu0 0.0
    %293 = vmatpush2.msra.mxu0 0.0
    %294 = vmatprep.subr.mxu0 0.0
    %295 = vmatpush2.msra.mxu0 0.0
    %296 = vmatprep.subr.mxu0 0.0
    %297 = vmatpush2.msra.mxu0 0.0
    %298 = vmatprep.subr.mxu0 0.0
    %299 = vmatpush2.msra.mxu0 0.0
    %300 = vmatprep.subr.mxu0 0.0
    %301 = vmatpush2.msra.mxu0 0.0
    %302 = vmatprep.subr.mxu0 0.0
    %303 = vmatpush2.msra.mxu0 0.0
    %304 = vmatprep.subr.mxu0 0.0
    %305 = vmatpush2.msra.mxu0 0.0
    %306 = vmatprep.subr.mxu0 0.0
    %307 = vmatpush2.msra.mxu0 0.0
    %308 = vmatprep.subr.mxu0 0.0
    %309 = vmatpush2.msra.mxu0 0.0
    %310 = vmatprep.subr.mxu0 0.0
    %311 = vmatpush2.msra.mxu0 0.0
    %312 = vmatprep.subr.mxu0 0.0
    %313 = vmatpush2.msra.mxu0 0.0
    %314 = vmatprep.subr.mxu0 0.0
    %315 = vmatpush2.msra.mxu0 0.0
    %316 = vmatprep.subr.mxu0 0.0
    %317 = vmatpush2.msra.mxu0 0.0
    %318 = vmatprep.subr.mxu0 0.0
    %319 = vmatpush2.msra.mxu0 0.0
    %320 = vmatprep.subr.mxu0 0.0
    %321 = vmatpush2.msra.mxu0 0.0
    %322 = vmatprep.subr.mxu0 0.0
    %323 = vmatpush2.msra.mxu0 0.0
    %324 = vmatprep.mubr.f32.mxu0 0.0
    %325 = vmatmul.mubr.f32.gmra.mxu0 %v232
    %v326 = vpop.f32.mrf.mxu0
    %v327 = vadd.f32 %v258, %v326
    %v328 = vpop.f32.mrf.mxu0
    %329 = vdwg.mxu0
    %v330 = vmax.f32 %v327, 0.0
    %s331 = scalar_lea.vmem [#allocation7], 16
    %332 = vst [vmem:[%s331] sm:$0xff] %v330
    // Predicated region
    $region22: #{_fused_resident.1} parent=1 // pred_check
      _
    $region23: #{_fused_resident.1} parent=1 // pred_check_branch
      %334 = sbr.rel (0) target = $region25
    $region24: #{_fused_resident.1} parent=1 // pred_region
      %s336 = ssub.s32 384, 384
      %337 = vsyncadd [#allocation4], %s336
      %s338 = sshll.u32 [#allocation7], 4
      %s339 = int_to_ptr.vmem [resolvable:$true] %s338
      %344 = dma.vmem_to_hbm [thread:$0]  %s339, 384, %s3, [#allocation4], 128, 128, 8
    $region25: #{_fused_resident.1} parent=1 // pred_fallthru
      _
    // Predicated region
    $region26: #{_fused_resident.1} parent=1 // pred_check
      _
    $region27: #{_fused_resident.1} parent=1 // pred_check_branch
      %346 = sbr.rel (0) target = $region29
    $region28: #{_fused_resident.1} parent=1 // pred_region
      %347 = dma.done [#allocation4], 384
    $region29: #{_fused_resident.1} parent=1 // pred_fallthru
      _
    %348 = vsyncpa [#allocation3], 1
    %349 = vsyncpa [#allocation6], 1
    %350 = vsyncpa [#allocation4], 1

</llo_original>
